<compile_context>
chip_gen: v5e
topology: v5e:2x2
jax: 0.10.0
libtpu: 0.0.40
codegen_flags: <defaults>
</compile_context>

<pallas_src>
import jax
import jax.numpy as jnp
from jax.experimental import pallas as pl
from jax.experimental.pallas import tpu as pltpu

BN_EPS = 1e-5


def _bn_onepass(h, gamma, beta, inv_b):
    """Training-mode BatchNorm over axis 0: single-pass stats + folded affine."""
    s1 = jnp.sum(h, axis=0, keepdims=True)
    s2 = jnp.sum(h * h, axis=0, keepdims=True)
    mu = s1 * inv_b
    var = jnp.maximum(s2 * inv_b - mu * mu, 0.0)
    scale = gamma * jax.lax.rsqrt(var + BN_EPS)
    shift = beta - mu * scale
    return h * scale + shift


def conf_model_kernel(x_ref, pp_ref, bn3_ref, out_ref):
    B, in_size = x_ref.shape
    H = pp_ref.shape[1]
    inv_b = 1.0 / float(B)                      # trace-time constant

    x = x_ref[...]

    # Unpack the single parameter array (see conf_model_forward for layout).
    w1 = pp_ref[0:in_size, :]                   # [IN, H]
    w2 = pp_ref[in_size:in_size + H, :]         # [H, H]
    r = in_size + H
    g1 = pp_ref[r + 0:r + 1, :]                 # [1, H]
    be1 = pp_ref[r + 1:r + 2, :]                # [1, H]
    g2 = pp_ref[r + 2:r + 3, :]                 # [1, H]
    be2 = pp_ref[r + 3:r + 4, :]                # [1, H]
    w3 = pp_ref[r + 4:r + 5, :]                 # [1, H]  (last Linear weight row)

    # Layer 0: Linear (bias dropped -- cancels in BN) -> BN -> ReLU
    h = jnp.dot(x, w1, preferred_element_type=jnp.float32)
    h = jnp.maximum(_bn_onepass(h, g1, be1, inv_b), 0.0)

    # Layer 1: Linear -> BN -> ReLU
    h = jnp.dot(h, w2, preferred_element_type=jnp.float32)
    h = jnp.maximum(_bn_onepass(h, g2, be2, inv_b), 0.0)

    # Layer 2: Linear(H, 1) as VPU multiply + reduction instead of an N=1 MXU
    # matmul; result is laid out lane-dense as [1, B] (batch on lanes).
    z = jnp.sum(jnp.transpose(h * w3), axis=0, keepdims=True)        # [1, B]

    # BN over the single output feature (stats across the batch / lane axis).
    s1 = jnp.sum(z, axis=1, keepdims=True)
    s2 = jnp.sum(z * z, axis=1, keepdims=True)
    mu = s1 * inv_b
    var = jnp.maximum(s2 * inv_b - mu * mu, 0.0)
    scale = bn3_ref[0] * jax.lax.rsqrt(var + BN_EPS)                 # [1, 1]
    shift = bn3_ref[1] - mu * scale
    out_ref[...] = z * scale + shift                                 # [1, B]


def conf_model_forward(x, params):
    """x: [B, input_size] f32.

    params: list of 3 tuples (W [in, out], b [1, out], gamma [1, out],
    beta [1, out]) matching nn.Linear / nn.BatchNorm1d (training mode).
    Returns [B, 1], matching the PyTorch module.
    """
    B, _ = x.shape
    (w1, b1, g1, be1), (w2, b2, g2, be2), (w3, b3, g3, be3) = params
    H1, H2 = w1.shape[1], w2.shape[1]
    assert H1 == H2 and w3.shape == (H2, 1), "packing assumes equal hidden widths"
    del b1, b2, b3  # additive biases before a batch-mean-subtracting BN cancel exactly

    # Single packed VMEM parameter array: rows = [W1; W2; g1; b1; g2; b2; w3^T].
    param_pack = jnp.concatenate(
        [w1, w2, g1, be1, g2, be2, jnp.transpose(w3)], axis=0
    ).astype(jnp.float32)
    # The two leftover scalars (final-layer BN affine) ride in SMEM.
    bn3_scalars = jnp.stack([g3.reshape(()), be3.reshape(())]).astype(jnp.float32)

    vmem = pl.BlockSpec(memory_space=pltpu.MemorySpace.VMEM)
    smem = pl.BlockSpec(memory_space=pltpu.MemorySpace.SMEM)

    out_row = pl.pallas_call(
        conf_model_kernel,
        out_shape=jax.ShapeDtypeStruct((1, B), jnp.float32),
        in_specs=[vmem, vmem, smem],
        out_specs=vmem,
        compiler_params=pltpu.CompilerParams(vmem_limit_bytes=32 * 1024 * 1024),
        # TODO(synk): for large B, add a batch grid (dimension_semantics=("parallel",))
        # with two-pass BN partial sums; per-tile BN stats would silently change the
        # model's semantics, so batch tiling is intentionally not done at this size.
    )(x, param_pack, bn3_scalars)
    return jnp.transpose(out_row)   # [B, 1]


def init_params(key, input_size, hidden_sizes=(32, 32)):
    """Synthetic params mirroring nn.Linear / nn.BatchNorm1d shapes.

    BN gamma/beta are perturbed away from (1, 0) so the affine path (incl. the
    SMEM scalars of the last layer) is actually exercised by the check.
    """
    sizes = [input_size] + list(hidden_sizes) + [1]
    params = []
    for i in range(len(sizes) - 1):
        key, kw, kb, kg, kbe = jax.random.split(key, 5)
        fan_in = sizes[i]
        bound = 1.0 / (fan_in ** 0.5)
        w = jax.random.uniform(kw, (sizes[i], sizes[i + 1]), jnp.float32, -bound, bound)
        b = jax.random.uniform(kb, (1, sizes[i + 1]), jnp.float32, -bound, bound)
        gamma = 1.0 + 0.1 * jax.random.normal(kg, (1, sizes[i + 1]), jnp.float32)
        beta = 0.1 * jax.random.normal(kbe, (1, sizes[i + 1]), jnp.float32)
        params.append((w, b, gamma, beta))
    return params


def conf_model_reference(x, params):
    """Pure-JAX reference with the exact PyTorch training-mode math (incl. biases)."""
    n = len(params)
    h = x
    for i, (w, b, g, be) in enumerate(params):
        h = h @ w + b
        mu = jnp.mean(h, axis=0, keepdims=True)
        var = jnp.mean((h - mu) ** 2, axis=0, keepdims=True)
        h = (h - mu) * jax.lax.rsqrt(var + BN_EPS) * g + be
        if i != n - 1:
            h = jnp.maximum(h, 0.0)
    return h


if __name__ == "__main__":
    key = jax.random.PRNGKey(0)
    k_x, k_p = jax.random.split(key)

    B, INPUT_SIZE = 8, 32
    x = jax.random.normal(k_x, (B, INPUT_SIZE), jnp.float32)
    params = init_params(k_p, INPUT_SIZE, hidden_sizes=(32, 32))

    out = conf_model_forward(x, params)
    out = jax.block_until_ready(out)

    ref = conf_model_reference(x, params)
    assert out.shape == (B, 1)
    assert jnp.allclose(out, ref, atol=1e-4, rtol=1e-4), "mismatch vs reference"

    print("KERNEL_OK")
</pallas_src>

<mosaic_0001>
module attributes {stable_mosaic.version = 11 : i64} {
  func.func @conf_model_kernel(%arg0: memref<8x32xf32, #tpu.memory_space<vmem>>, %arg1: memref<69x32xf32, #tpu.memory_space<vmem>>, %arg2: memref<2xf32, #tpu.memory_space<smem>>, %arg3: memref<1x8xf32, #tpu.memory_space<vmem>>) attributes {dimension_semantics = [], scalar_prefetch = 0 : i64, scratch_operands = 0 : i64, tpu.core_type = #tpu.core_type<tc>} {
    %c0 = arith.constant 0 : index
    %c0_0 = arith.constant 0 : index
    %0 = vector.load %arg0[%c0, %c0_0] : memref<8x32xf32, #tpu.memory_space<vmem>>, vector<8x32xf32>
    %c0_1 = arith.constant 0 : index
    %c0_2 = arith.constant 0 : index
    %1 = vector.load %arg1[%c0_1, %c0_2] : memref<69x32xf32, #tpu.memory_space<vmem>>, vector<32x32xf32>
    %c32 = arith.constant 32 : index
    %c0_3 = arith.constant 0 : index
    %2 = vector.load %arg1[%c32, %c0_3] : memref<69x32xf32, #tpu.memory_space<vmem>>, vector<32x32xf32>
    %c64 = arith.constant 64 : index
    %c0_4 = arith.constant 0 : index
    %3 = vector.load %arg1[%c64, %c0_4] : memref<69x32xf32, #tpu.memory_space<vmem>>, vector<1x32xf32>
    %c65 = arith.constant 65 : index
    %c0_5 = arith.constant 0 : index
    %4 = vector.load %arg1[%c65, %c0_5] : memref<69x32xf32, #tpu.memory_space<vmem>>, vector<1x32xf32>
    %c66 = arith.constant 66 : index
    %c0_6 = arith.constant 0 : index
    %5 = vector.load %arg1[%c66, %c0_6] : memref<69x32xf32, #tpu.memory_space<vmem>>, vector<1x32xf32>
    %c67 = arith.constant 67 : index
    %c0_7 = arith.constant 0 : index
    %6 = vector.load %arg1[%c67, %c0_7] : memref<69x32xf32, #tpu.memory_space<vmem>>, vector<1x32xf32>
    %c68 = arith.constant 68 : index
    %c0_8 = arith.constant 0 : index
    %7 = vector.load %arg1[%c68, %c0_8] : memref<69x32xf32, #tpu.memory_space<vmem>>, vector<1x32xf32>
    %cst = arith.constant dense<0.000000e+00> : vector<8x32xf32>
    %8 = tpu.matmul %0, %1, %cst {dimension_numbers = #tpu.dot_dimension_numbers<[1], [0], [0], [1], [0, 0, 1, 1], [], []>} : vector<8x32xf32>, vector<32x32xf32>, vector<8x32xf32> -> vector<8x32xf32>
    %cst_9 = arith.constant dense<0.000000e+00> : vector<32xf32>
    %9 = vector.multi_reduction <add>, %8, %cst_9 [0] : vector<8x32xf32> to vector<32xf32>
    %10 = vector.shape_cast %9 : vector<32xf32> to vector<1x32xf32>
    %11 = arith.mulf %8, %8 : vector<8x32xf32>
    %cst_10 = arith.constant dense<0.000000e+00> : vector<32xf32>
    %12 = vector.multi_reduction <add>, %11, %cst_10 [0] : vector<8x32xf32> to vector<32xf32>
    %13 = vector.shape_cast %12 : vector<32xf32> to vector<1x32xf32>
    %cst_11 = arith.constant 1.250000e-01 : f32
    %14 = vector.broadcast %cst_11 : f32 to vector<1x32xf32>
    %15 = arith.mulf %10, %14 : vector<1x32xf32>
    %cst_12 = arith.constant 1.250000e-01 : f32
    %16 = vector.broadcast %cst_12 : f32 to vector<1x32xf32>
    %17 = arith.mulf %13, %16 : vector<1x32xf32>
    %18 = arith.mulf %15, %15 : vector<1x32xf32>
    %19 = arith.subf %17, %18 : vector<1x32xf32>
    %cst_13 = arith.constant 0.000000e+00 : f32
    %20 = vector.broadcast %cst_13 : f32 to vector<1x32xf32>
    %21 = arith.maximumf %19, %20 : vector<1x32xf32>
    %cst_14 = arith.constant 9.99999974E-6 : f32
    %22 = vector.broadcast %cst_14 : f32 to vector<1x32xf32>
    %23 = arith.addf %21, %22 : vector<1x32xf32>
    %24 = math.rsqrt %23 : vector<1x32xf32>
    %25 = arith.mulf %3, %24 : vector<1x32xf32>
    %26 = arith.mulf %15, %25 : vector<1x32xf32>
    %27 = arith.subf %4, %26 : vector<1x32xf32>
    %28 = vector.broadcast %25 : vector<1x32xf32> to vector<8x32xf32>
    %29 = arith.mulf %8, %28 : vector<8x32xf32>
    %30 = vector.broadcast %27 : vector<1x32xf32> to vector<8x32xf32>
    %31 = arith.addf %29, %30 : vector<8x32xf32>
    %cst_15 = arith.constant 0.000000e+00 : f32
    %32 = vector.broadcast %cst_15 : f32 to vector<8x32xf32>
    %33 = arith.maximumf %31, %32 : vector<8x32xf32>
    %cst_16 = arith.constant dense<0.000000e+00> : vector<8x32xf32>
    %34 = tpu.matmul %33, %2, %cst_16 {dimension_numbers = #tpu.dot_dimension_numbers<[1], [0], [0], [1], [0, 0, 1, 1], [], []>} : vector<8x32xf32>, vector<32x32xf32>, vector<8x32xf32> -> vector<8x32xf32>
    %cst_17 = arith.constant dense<0.000000e+00> : vector<32xf32>
    %35 = vector.multi_reduction <add>, %34, %cst_17 [0] : vector<8x32xf32> to vector<32xf32>
    %36 = vector.shape_cast %35 : vector<32xf32> to vector<1x32xf32>
    %37 = arith.mulf %34, %34 : vector<8x32xf32>
    %cst_18 = arith.constant dense<0.000000e+00> : vector<32xf32>
    %38 = vector.multi_reduction <add>, %37, %cst_18 [0] : vector<8x32xf32> to vector<32xf32>
    %39 = vector.shape_cast %38 : vector<32xf32> to vector<1x32xf32>
    %cst_19 = arith.constant 1.250000e-01 : f32
    %40 = vector.broadcast %cst_19 : f32 to vector<1x32xf32>
    %41 = arith.mulf %36, %40 : vector<1x32xf32>
    %cst_20 = arith.constant 1.250000e-01 : f32
    %42 = vector.broadcast %cst_20 : f32 to vector<1x32xf32>
    %43 = arith.mulf %39, %42 : vector<1x32xf32>
    %44 = arith.mulf %41, %41 : vector<1x32xf32>
    %45 = arith.subf %43, %44 : vector<1x32xf32>
    %cst_21 = arith.constant 0.000000e+00 : f32
    %46 = vector.broadcast %cst_21 : f32 to vector<1x32xf32>
    %47 = arith.maximumf %45, %46 : vector<1x32xf32>
    %cst_22 = arith.constant 9.99999974E-6 : f32
    %48 = vector.broadcast %cst_22 : f32 to vector<1x32xf32>
    %49 = arith.addf %47, %48 : vector<1x32xf32>
    %50 = math.rsqrt %49 : vector<1x32xf32>
    %51 = arith.mulf %5, %50 : vector<1x32xf32>
    %52 = arith.mulf %41, %51 : vector<1x32xf32>
    %53 = arith.subf %6, %52 : vector<1x32xf32>
    %54 = vector.broadcast %51 : vector<1x32xf32> to vector<8x32xf32>
    %55 = arith.mulf %34, %54 : vector<8x32xf32>
    %56 = vector.broadcast %53 : vector<1x32xf32> to vector<8x32xf32>
    %57 = arith.addf %55, %56 : vector<8x32xf32>
    %cst_23 = arith.constant 0.000000e+00 : f32
    %58 = vector.broadcast %cst_23 : f32 to vector<8x32xf32>
    %59 = arith.maximumf %57, %58 : vector<8x32xf32>
    %60 = vector.broadcast %7 : vector<1x32xf32> to vector<8x32xf32>
    %61 = arith.mulf %59, %60 : vector<8x32xf32>
    %62 = tpu.transpose %61, [1, 0] : vector<8x32xf32> -> vector<32x8xf32>
    %cst_24 = arith.constant dense<0.000000e+00> : vector<8xf32>
    %63 = vector.multi_reduction <add>, %62, %cst_24 [0] : vector<32x8xf32> to vector<8xf32>
    %64 = vector.shape_cast %63 : vector<8xf32> to vector<1x8xf32>
    %cst_25 = arith.constant dense<0.000000e+00> : vector<1xf32>
    %65 = vector.multi_reduction <add>, %64, %cst_25 [1] : vector<1x8xf32> to vector<1xf32>
    %66 = vector.shape_cast %65 : vector<1xf32> to vector<1x1xf32>
    %67 = arith.mulf %64, %64 : vector<1x8xf32>
    %cst_26 = arith.constant dense<0.000000e+00> : vector<1xf32>
    %68 = vector.multi_reduction <add>, %67, %cst_26 [1] : vector<1x8xf32> to vector<1xf32>
    %69 = vector.shape_cast %68 : vector<1xf32> to vector<1x1xf32>
    %cst_27 = arith.constant 1.250000e-01 : f32
    %70 = vector.broadcast %cst_27 : f32 to vector<1x1xf32>
    %71 = arith.mulf %66, %70 : vector<1x1xf32>
    %cst_28 = arith.constant 1.250000e-01 : f32
    %72 = vector.broadcast %cst_28 : f32 to vector<1x1xf32>
    %73 = arith.mulf %69, %72 : vector<1x1xf32>
    %74 = arith.mulf %71, %71 : vector<1x1xf32>
    %75 = arith.subf %73, %74 : vector<1x1xf32>
    %cst_29 = arith.constant 0.000000e+00 : f32
    %76 = vector.broadcast %cst_29 : f32 to vector<1x1xf32>
    %77 = arith.maximumf %75, %76 : vector<1x1xf32>
    %c0_30 = arith.constant 0 : index
    %78 = memref.load %arg2[%c0_30] : memref<2xf32, #tpu.memory_space<smem>>
    %cst_31 = arith.constant 9.99999974E-6 : f32
    %79 = vector.broadcast %cst_31 : f32 to vector<1x1xf32>
    %80 = arith.addf %77, %79 : vector<1x1xf32>
    %81 = math.rsqrt %80 : vector<1x1xf32>
    %82 = vector.broadcast %78 : f32 to vector<1x1xf32>
    %83 = arith.mulf %82, %81 : vector<1x1xf32>
    %c1 = arith.constant 1 : index
    %84 = memref.load %arg2[%c1] : memref<2xf32, #tpu.memory_space<smem>>
    %85 = arith.mulf %71, %83 : vector<1x1xf32>
    %86 = vector.broadcast %84 : f32 to vector<1x1xf32>
    %87 = arith.subf %86, %85 : vector<1x1xf32>
    %88 = vector.broadcast %83 : vector<1x1xf32> to vector<1x8xf32>
    %89 = arith.mulf %64, %88 : vector<1x8xf32>
    %90 = vector.broadcast %87 : vector<1x1xf32> to vector<1x8xf32>
    %91 = arith.addf %89, %90 : vector<1x8xf32>
    %c0_32 = arith.constant 0 : index
    %c0_33 = arith.constant 0 : index
    %92 = vector.load %arg3[%c0_32, %c0_33] : memref<1x8xf32, #tpu.memory_space<vmem>>, vector<1x8xf32>
    tpu.vector_store %arg3[%c0_32, %c0_33], %91 {strides = array<i32>} : memref<1x8xf32, #tpu.memory_space<vmem>>, vector<1x8xf32>,
    return
  }
}

</mosaic_0001>

<llo_original>
// kernel: tpu_custom_call.1
$region0: #{tpu_custom_call.1}
  #allocation0 [shape = 'u32[]', space=smem, size = 0x4, offset = 0x4, fixed_abs, tag = 'smem constant byte address 0x4 - core index']
  #allocation1 [shape = 'u32[72,128]{1,0:T(1,128)}', space=vmem, size = 0x9000, scoped, tag = 'internal scratch']
  %s0 = inlined_call_operand.vmem [shape: f32[8,32], index: 0, kind: input, shape index: {}]
  %s1 = inlined_call_operand.vmem [shape: f32[69,32], index: 1, kind: input, shape index: {}]
  %s2 = inlined_call_operand.vmem [shape: f32[2], index: 2, kind: input, shape index: {}]
  %s3 = inlined_call_operand.hbm [shape: f32[1,8], index: 3, kind: output, shape index: {}]
  %s4 = sld [smem:[#allocation0]]
  $region26: #{tpu_custom_call.1} parent=0
    _
  %s6 = ssub.s32 1, %s4
  %s7 = scalar_select 0, %s6, %s4
  $region1: #{tpu_custom_call.1} parent=0
    #allocation2 [shape = 'u8[512]{0}', space=smem, size = 0x200, scoped, tag = 'input window, operand 2, single buffered']
    #allocation3 [shape = 's32[1]{0}', space=sflag, size = 0x4, scoped, tag = 'scoped memory for tpu_custom_call.1']
    #allocation4 [shape = 's32[1]{0}', space=sflag, size = 0x4, scoped, tag = 'scoped memory for tpu_custom_call.1']
    #allocation5 [shape = 'u8[512]{0}', space=vmem, size = 0x400, scoped, tag = 'output window, operand 0, single buffered']
    %8 = vsyncpa [#allocation4], 0
    %9 = vsyncpa [#allocation3], 0
    // Predicated region
    $region2: #{tpu_custom_call.1} parent=1 // pred_check
      _
    $region3: #{tpu_custom_call.1} parent=1 // pred_check_branch
      %11 = sbr.rel (0) target = $region5
    $region4: #{tpu_custom_call.1} parent=1 // pred_region
      _
    $region5: #{tpu_custom_call.1} parent=1 // pred_fallthru
      _
    // Predicated region
    $region6: #{tpu_custom_call.1} parent=1 // pred_check
      _
    $region7: #{tpu_custom_call.1} parent=1 // pred_check_branch
      %13 = sbr.rel (0) target = $region9
    $region8: #{tpu_custom_call.1} parent=1 // pred_region
      _
    $region9: #{tpu_custom_call.1} parent=1 // pred_fallthru
      _
    // Predicated region
    $region10: #{tpu_custom_call.1} parent=1 // pred_check
      _
    $region11: #{tpu_custom_call.1} parent=1 // pred_check_branch
      %15 = sbr.rel (0) target = $region13
    $region12: #{tpu_custom_call.1} parent=1 // pred_region
      %17 = vsyncadd [#allocation4], 0
      %s19 = sshll.u32 %s2, 4
      %s20 = int_to_ptr.vmem [resolvable:$true] %s19
      %22 = dma.vmem_to_smem %s20, 16, [#allocation2], [#allocation4]
    $region13: #{tpu_custom_call.1} parent=1 // pred_fallthru
      _
    // Predicated region
    $region14: #{tpu_custom_call.1} parent=1 // pred_check
      _
    $region15: #{tpu_custom_call.1} parent=1 // pred_check_branch
      %24 = sbr.rel (0) target = $region17
    $region16: #{tpu_custom_call.1} parent=1 // pred_region
      %26 = dma.done [#allocation4], 16
    $region17: #{tpu_custom_call.1} parent=1 // pred_fallthru
      _
    %27 = sfence
    %v28 = vld [vmem:[%s0] sm:$0xff]
    %v29 = vld [vmem:[%s1] sm:$0xff]
    %v30 = vld [vmem:[%s1 + $0x8] sm:$0xff]
    %v31 = vld [vmem:[%s1 + $0x10] sm:$0xff]
    %v32 = vld [vmem:[%s1 + $0x18] sm:$0xff]
    %v33 = vld [vmem:[%s1 + $0x20] sm:$0xff]
    %v34 = vld [vmem:[%s1 + $0x28] sm:$0xff]
    %v35 = vld [vmem:[%s1 + $0x30] sm:$0xff]
    %v36 = vld [vmem:[%s1 + $0x38] sm:$0xff]
    %v37 = vld [vmem:[%s1 + $0x40] sm:$0x1]
    %v38 = vld [vmem:[%s1 + $0x41] sm:$0x1]
    %v39 = vld [vmem:[%s1 + $0x42] sm:$0x1]
    %v40 = vld [vmem:[%s1 + $0x43] sm:$0x1]
    %v41 = vld [vmem:[%s1 + $0x44] sm:$0x1]
    %vm42 = vcmask 261120
    %v44 = vsel %vm42, %v28, 0
    %46 = vmatpush.msra.mxu0 0.0
    %47 = vmatpush.msra.mxu0 0.0
    %48 = vmatpush.msra.mxu0 0.0
    %49 = vmatpush.msra.mxu0 0.0
    %50 = vmatpush.msra.mxu0 0.0
    %51 = vmatpush.msra.mxu0 0.0
    %52 = vmatpush.msra.mxu0 0.0
    %53 = vmatpush.msra.mxu0 0.0
    %54 = vmatpush.msra.mxu0 0.0
    %55 = vmatpush.msra.mxu0 0.0
    %56 = vmatpush.msra.mxu0 0.0
    %57 = vmatpush.msra.mxu0 0.0
    %58 = vmatpush.msra.mxu0 %v32
    %59 = vmatpush.msra.mxu0 %v31
    %60 = vmatpush.msra.mxu0 %v30
    %61 = vmatpush.msra.mxu0 %v29
    %62 = vmatmul.f32.gmra.mxu0 %v44
    %v63 = vpop.f32.mrf.mxu0
    %v64 = vadd.f32 0.0, %v63
    %65 = vdwg.mxu0
    %v66 = vsel %vm42, %v64, 0.0
    %v67 = vrot.slane %v66, 4
    %v68 = vadd.f32 %v66, %v67
    %v69 = vrot.slane %v68, 2
    %v70 = vadd.f32 %v68, %v69
    %v71 = vrot.slane %v70, 1
    %v72 = vadd.f32 %v70, %v71
    %v73 = vmul.f32 %v64, %v64
    %v74 = vsel %vm42, %v73, 0.0
    %v75 = vrot.slane %v74, 4
    %v76 = vadd.f32 %v74, %v75
    %v77 = vrot.slane %v76, 2
    %v78 = vadd.f32 %v76, %v77
    %v79 = vrot.slane %v78, 1
    %v80 = vadd.f32 %v78, %v79
    %v81 = vmul.f32 %v72, 0.125
    %v82 = vmul.f32 %v80, 0.125
    %v83 = vmul.f32 %v81, %v81
    %v84 = vsub.f32 %v82, %v83
    %v85 = vmax.f32 %v84, 0.0
    %v86 = vadd.f32 %v85, 1e-05
    %v87 = vrsqrt.pop %v86
    %v88 = vmul.f32 %v87, %v86
    %v89 = vmul.f32 %v88, %v87
    %v90 = vmul.f32 0.5, %v89
    %v91 = vsub.f32 1.5, %v90
    %v92 = vmul.f32 %v87, %v91
    %vm93 = vweird.f32 %v86
    %vm94 = vweird.f32 %v87
    %vm95 = vmor %vm93, %vm94
    %v96 = vsel %vm95, %v87, %v92
    %v97 = vmul.f32 %v37, %v96
    %v98 = vmul.f32 %v81, %v97
    %v99 = vsub.f32 %v38, %v98
    %v100 = vperm.slane %v97, 0
    %v101 = vmul.f32 %v64, %v100
    %v102 = vperm.slane %v99, 0
    %v103 = vadd.f32 %v101, %v102
    %v104 = vmax.f32 %v103, 0.0
    %v106 = vsel %vm42, %v104, 0
    %108 = vmatpush.msra.mxu0 0.0
    %109 = vmatpush.msra.mxu0 0.0
    %110 = vmatpush.msra.mxu0 0.0
    %111 = vmatpush.msra.mxu0 0.0
    %112 = vmatpush.msra.mxu0 0.0
    %113 = vmatpush.msra.mxu0 0.0
    %114 = vmatpush.msra.mxu0 0.0
    %115 = vmatpush.msra.mxu0 0.0
    %116 = vmatpush.msra.mxu0 0.0
    %117 = vmatpush.msra.mxu0 0.0
    %118 = vmatpush.msra.mxu0 0.0
    %119 = vmatpush.msra.mxu0 0.0
    %120 = vmatpush.msra.mxu0 %v36
    %121 = vmatpush.msra.mxu0 %v35
    %122 = vmatpush.msra.mxu0 %v34
    %123 = vmatpush.msra.mxu0 %v33
    %124 = vmatmul.f32.gmra.mxu0 %v106
    %v125 = vpop.f32.mrf.mxu0
    %v126 = vadd.f32 0.0, %v125
    %127 = vdwg.mxu0
    %v128 = vsel %vm42, %v126, 0.0
    %v129 = vrot.slane %v128, 4
    %v130 = vadd.f32 %v128, %v129
    %v131 = vrot.slane %v130, 2
    %v132 = vadd.f32 %v130, %v131
    %v133 = vrot.slane %v132, 1
    %v134 = vadd.f32 %v132, %v133
    %v135 = vmul.f32 %v126, %v126
    %v136 = vsel %vm42, %v135, 0.0
    %v137 = vrot.slane %v136, 4
    %v138 = vadd.f32 %v136, %v137
    %v139 = vrot.slane %v138, 2
    %v140 = vadd.f32 %v138, %v139
    %v141 = vrot.slane %v140, 1
    %v142 = vadd.f32 %v140, %v141
    %v143 = vmul.f32 %v134, 0.125
    %v144 = vmul.f32 %v142, 0.125
    %v145 = vmul.f32 %v143, %v143
    %v146 = vsub.f32 %v144, %v145
    %v147 = vmax.f32 %v146, 0.0
    %v148 = vadd.f32 %v147, 1e-05
    %v149 = vrsqrt.pop %v148
    %v150 = vmul.f32 %v149, %v148
    %v151 = vmul.f32 %v150, %v149
    %v152 = vmul.f32 0.5, %v151
    %v153 = vsub.f32 1.5, %v152
    %v154 = vmul.f32 %v149, %v153
    %vm155 = vweird.f32 %v148
    %vm156 = vweird.f32 %v149
    %vm157 = vmor %vm155, %vm156
    %v158 = vsel %vm157, %v149, %v154
    %v159 = vmul.f32 %v39, %v158
    %v160 = vmul.f32 %v143, %v159
    %v161 = vsub.f32 %v40, %v160
    %v162 = vperm.slane %v159, 0
    %v163 = vmul.f32 %v126, %v162
    %v164 = vperm.slane %v161, 0
    %v165 = vadd.f32 %v163, %v164
    %v166 = vmax.f32 %v165, 0.0
    %v167 = vperm.slane %v41, 0
    %v168 = vmul.f32 %v166, %v167
    %169 = vxpose.xlu0.b32.start [1/16] %v168, 128
    %170 = vxpose.xlu0.b32.cont [2/16] 0.0, 128
    %171 = vxpose.xlu0.b32.cont [3/16] 0.0, 128
    %172 = vxpose.xlu0.b32.cont [4/16] 0.0, 128
    %173 = vxpose.xlu0.b32.cont [5/16] 0.0, 128
    %174 = vxpose.xlu0.b32.cont [6/16] 0.0, 128
    %175 = vxpose.xlu0.b32.cont [7/16] 0.0, 128
    %176 = vxpose.xlu0.b32.cont [8/16] 0.0, 128
    %177 = vxpose.xlu0.b32.cont [9/16] 0.0, 128
    %178 = vxpose.xlu0.b32.cont [10/16] 0.0, 128
    %179 = vxpose.xlu0.b32.cont [11/16] 0.0, 128
    %180 = vxpose.xlu0.b32.cont [12/16] 0.0, 128
    %181 = vxpose.xlu0.b32.cont [13/16] 0.0, 128
    %182 = vxpose.xlu0.b32.cont [14/16] 0.0, 128
    %183 = vxpose.xlu0.b32.cont [15/16] 0.0, 128
    %184 = vxpose.xlu0.b32.end [16/16] 0.0, 128
    %v185 = vpop.trf.xlu0
    %v186 = vpop.trf.xlu0
    %v187 = vpop.trf.xlu0
    %v188 = vpop.trf.xlu0
    %v189 = vpop.trf.xlu0
    %v190 = vpop.trf.xlu0
    %v191 = vpop.trf.xlu0
    %v192 = vpop.trf.xlu0
    %v193 = vpop.trf.xlu0
    %v194 = vpop.trf.xlu0
    %v195 = vpop.trf.xlu0
    %v196 = vpop.trf.xlu0
    %v197 = vpop.trf.xlu0
    %v198 = vpop.trf.xlu0
    %v199 = vpop.trf.xlu0
    %v200 = vpop.trf.xlu0
    %vm201 = vcmask 64512
    %v202 = vsel %vm201, %v185, 0.0
    %v203 = vsel %vm201, %v186, 0.0
    %v204 = vadd.f32 %v202, %v203
    %v205 = vsel %vm201, %v187, 0.0
    %v206 = vadd.f32 %v204, %v205
    %v207 = vsel %vm201, %v188, 0.0
    %v208 = vadd.f32 %v206, %v207
    %v209 = vrot.slane %v208, 4
    %v210 = vadd.f32 %v208, %v209
    %v211 = vrot.slane %v210, 2
    %v212 = vadd.f32 %v210, %v211
    %v213 = vrot.slane %v212, 1
    %v214 = vadd.f32 %v212, %v213
    %v215 = vsel %vm201, %v214, 0.0
    %216 = vadd.xlane.f32.xlu0 %v215
    %v217 = vpop.xlane.xlu0 %216
    %v218 = vmul.f32 %v214, %v214
    %v219 = vsel %vm201, %v218, 0.0
    %220 = vadd.xlane.f32.xlu0 %v219
    %v221 = vpop.xlane.xlu0 %220
    %v222 = vmul.f32 %v217, 0.125
    %v223 = vmul.f32 %v221, 0.125
    %v224 = vmul.f32 %v222, %v222
    %v225 = vsub.f32 %v223, %v224
    %v226 = vmax.f32 %v225, 0.0
    %s227 = sld [smem:[#allocation2]]
    %v228 = vadd.f32 %v226, 1e-05
    %v229 = vrsqrt.pop %v228
    %v230 = vmul.f32 %v229, %v228
    %v231 = vmul.f32 %v230, %v229
    %v232 = vmul.f32 0.5, %v231
    %v233 = vsub.f32 1.5, %v232
    %v234 = vmul.f32 %v229, %v233
    %vm235 = vweird.f32 %v228
    %vm236 = vweird.f32 %v229
    %vm237 = vmor %vm235, %vm236
    %v238 = vsel %vm237, %v229, %v234
    %v239 = vstv %s227
    %v240 = vmul.f32 %v239, %v238
    %s241 = sld [smem:[#allocation2 + $0x1]]
    %v242 = vmul.f32 %v222, %v240
    %v243 = vstv %s241
    %v244 = vsub.f32 %v243, %v242
    %v245 = vmul.f32 %v214, %v240
    %v246 = vadd.f32 %v245, %v244
    %vm247 = vcmask 57344
    %248 = vst.msk [vmem:[#allocation5] sm:$0x1] %vm247, %v246
    // Predicated region
    $region18: #{tpu_custom_call.1} parent=1 // pred_check
      _
    $region19: #{tpu_custom_call.1} parent=1 // pred_check_branch
      %250 = sbr.rel (0) target = $region21
    $region20: #{tpu_custom_call.1} parent=1 // pred_region
      %252 = vsyncadd [#allocation3], 0
      %s254 = sshll.u32 [#allocation5], 4
      %s255 = int_to_ptr.vmem [resolvable:$true] %s254
      %s256 = sshll.u32 %s3, 4
      %s257 = int_to_ptr.hbm [resolvable:$true] %s256
      %259 = dma.vmem_to_hbm [thread:$0]  %s255, 16, %s257, [#allocation3]
    $region21: #{tpu_custom_call.1} parent=1 // pred_fallthru
      _
    // Predicated region
    $region22: #{tpu_custom_call.1} parent=1 // pred_check
      _
    $region23: #{tpu_custom_call.1} parent=1 // pred_check_branch
      %261 = sbr.rel (0) target = $region25
    $region24: #{tpu_custom_call.1} parent=1 // pred_region
      %263 = dma.done [#allocation3], 16
    $region25: #{tpu_custom_call.1} parent=1 // pred_fallthru
      _
    %264 = vsyncpa [#allocation3], 1
    %265 = vsyncpa [#allocation4], 1

</llo_original>
